<compile_context>
chip_gen: v7x
topology: tpu7x:2x2x1
jax: 0.10.0
libtpu: 0.0.40
codegen_flags: <defaults>
</compile_context>

<pallas_src>
import functools

import jax
import jax.numpy as jnp
import numpy as np
from jax.experimental import pallas as pl
from jax.experimental.pallas import tpu as pltpu


# ------------------------------ Pallas kernel -------------------------------

def _proj_kernel(x_ref, m_ref, b_ref, o_ref, *, op_dtype):
    """One (tm, K) @ (K, N) row-tile of the collapsed deform-patch-embed matmul.

    x_ref: (tm, K)  flattened images in their native dtype (cast in-kernel)
    m_ref: (K, N)   collapsed gather+bilinear+conv matrix (VMEM-resident)
    b_ref: (1, N)   conv bias tiled over patches (f32)
    o_ref: (tm, N)  lane-dense output slab (N is a multiple of 128)
    """
    acc = jnp.dot(x_ref[...].astype(op_dtype), m_ref[...],
                  preferred_element_type=jnp.float32)
    o_ref[...] = (acc + b_ref[...]).astype(o_ref.dtype)


def _pick_tile_m(rows, sublane):
    # Large row tiles at video-scale B*T (per-step overhead amortization,
    # ~85% of HBM roofline at 512 vs ~29% at 128); tiny batches round up to
    # one sublane-packed tile instead of padding to 128.
    for t in (512, 256, 128):
        if rows >= t:
            return t
    return max(sublane, ((rows + sublane - 1) // sublane) * sublane)


# ------------------------------ Module wrapper -------------------------------

class TempDeformPatchEmbedPallas:
    """JAX/Pallas port of PAVER's TempDeformPatchEmbed (norm_layer=None)."""

    def __init__(self, img_size=16, patch_size=4, in_chans=3, embed_dim=32,
                 norm_layer=None, flatten=True, is_discrete=True,
                 use_bf16_operands=True, out_dtype=jnp.float32, key=None):
        assert flatten, "only flatten=True (module default) is implemented"
        assert norm_layer is None, "only norm_layer=None (nn.Identity) supported"
        self.img_size = (img_size, img_size)
        self.patch_size = (patch_size, patch_size)
        gh = img_size // patch_size
        gw = img_size // patch_size
        self.grid_size = (gh, gw)
        self.num_patches = gh * gw
        self.in_chans = in_chans
        self.embed_dim = embed_dim
        self.use_bf16_operands = use_bf16_operands
        self._out_dtype = out_dtype

        K = patch_size * patch_size
        P, C, E, H, W = self.num_patches, in_chans, embed_dim, img_size, img_size
        hi = jax.lax.Precision.HIGHEST

        key = jax.random.PRNGKey(0) if key is None else key
        k1, k2, k3 = jax.random.split(key, 3)

        # DeformConv2d parameters: weight (E, C, kh, kw), bias (E,).
        w_conv = 0.02 * jax.random.normal(
            k1, (E, C, patch_size, patch_size), dtype=jnp.float32)
        b_conv = 0.02 * jax.random.normal(k2, (E,), dtype=jnp.float32)

        # TODO(synk): compute_deform_offset (spherical tangent-plane offsets) is
        # not provided; synthesize a deterministic offset buffer of the correct
        # shape (2*kh*kw, grid_h, grid_w).  is_discrete -> integer offsets.
        offset = jax.random.uniform(k3, (2 * K, gh, gw), jnp.float32, -2.0, 2.0)
        if is_discrete:
            offset = jnp.round(offset)

        # ---- bilinear sampling positions per (patch p, kernel tap k) --------
        off_y = offset[0::2]                               # (K, gh, gw)
        off_x = offset[1::2]
        ks = jnp.arange(K)
        ki = (ks // patch_size).astype(jnp.float32)
        kj = (ks % patch_size).astype(jnp.float32)
        oh = jnp.arange(gh, dtype=jnp.float32)
        ow = jnp.arange(gw, dtype=jnp.float32)
        p_y = oh[None, :, None] * patch_size + ki[:, None, None] + off_y
        p_x = ow[None, None, :] * patch_size + kj[:, None, None] + off_x
        p_y = p_y.reshape(K, P).T                          # (P, K), row-major patches
        p_x = p_x.reshape(K, P).T

        y0 = jnp.floor(p_y)
        x0 = jnp.floor(p_x)
        ly, lx = p_y - y0, p_x - x0
        y0i, x0i = y0.astype(jnp.int32), x0.astype(jnp.int32)

        idx_y, idx_x, wbil = [], [], []
        corner_w = [(1.0 - ly) * (1.0 - lx), (1.0 - ly) * lx,
                    ly * (1.0 - lx), ly * lx]
        for n, (dy, dx) in enumerate([(0, 0), (0, 1), (1, 0), (1, 1)]):
            yi, xi = y0i + dy, x0i + dx
            valid = (yi >= 0) & (yi < H) & (xi >= 0) & (xi < W)
            wbil.append(corner_w[n] * valid.astype(jnp.float32))  # OOB -> weight 0
            idx_y.append(jnp.clip(yi, 0, H - 1))
            idx_x.append(jnp.clip(xi, 0, W - 1))
        idx_y = jnp.stack(idx_y)                           # (4, P, K) int32
        idx_x = jnp.stack(idx_x)                           # (4, P, K) int32
        wbil = jnp.stack(wbil)                             # (4, P, K) float32

        # ---- fold gather + bilinear + conv into ONE matrix ------------------
        # S[hw, p*K + k] = bilinear weight of pixel hw for (patch p, tap k)
        rows = (idx_y * W + idx_x).reshape(4, P * K)
        cols = jnp.broadcast_to(jnp.arange(P * K)[None, :], (4, P * K))
        S = jnp.zeros((H * W, P * K), jnp.float32).at[rows, cols].add(
            wbil.reshape(4, P * K))
        w_conv_r = w_conv.reshape(E, C, K)
        # M[(c, hw), (p, e)] = sum_k S[hw, p, k] * w_conv[e, c, k]
        M = jnp.einsum('hpk,eck->chpe', S.reshape(H * W, P, K), w_conv_r,
                       precision=hi).reshape(C * H * W, P * E)

        self._op_dtype = jnp.bfloat16 if use_bf16_operands else jnp.float32
        self._M = M.astype(self._op_dtype)                 # (C*H*W, P*E)
        self._bias_row = jnp.tile(b_conv, P).reshape(1, P * E)   # f32

        # un-collapsed pieces kept for the pure-JAX reference path
        self._idx_y, self._idx_x, self._wbil = idx_y, idx_x, wbil
        self._w_conv_r, self._b_conv = w_conv_r, b_conv

    # ---------------------------- Pallas forward ----------------------------

    def _embed(self, x):
        B, C, H, W = x.shape
        assert (H, W) == self.img_size, (
            f"Input image size ({H}*{W}) doesn't match model "
            f"({self.img_size[0]}*{self.img_size[1]}).")
        assert C == self.in_chans
        P, E = self.num_patches, self.embed_dim
        Kdim = C * H * W
        N = P * E

        # Free metadata reshape; x stays in its native dtype (cast in-kernel).
        xf = x.reshape(B, Kdim)

        sub = 16 if self._op_dtype == jnp.bfloat16 else 8   # sublane packing
        tm = _pick_tile_m(B, sub)
        grid = (pl.cdiv(B, tm),)   # ragged last block masked by Pallas; the
        # garbage padding rows only produce output rows that are never stored.

        x_bytes = xf.dtype.itemsize
        m_bytes = np.dtype(self._op_dtype).itemsize
        out_bytes = np.dtype(self._out_dtype).itemsize
        cost = pl.CostEstimate(
            flops=2 * B * Kdim * N,
            transcendentals=0,
            # M and the bias row are fetched once (constant block index).
            bytes_accessed=B * Kdim * x_bytes + Kdim * N * m_bytes
                           + N * 4 + B * N * out_bytes)

        y = pl.pallas_call(
            functools.partial(_proj_kernel, op_dtype=self._op_dtype),
            out_shape=jax.ShapeDtypeStruct((B, N), self._out_dtype),
            grid_spec=pltpu.PrefetchScalarGridSpec(
                num_scalar_prefetch=0,
                grid=grid,
                in_specs=[
                    pl.BlockSpec((tm, Kdim), lambda i: (i, 0)),
                    pl.BlockSpec((Kdim, N), lambda i: (0, 0)),   # VMEM-resident
                    pl.BlockSpec((1, N), lambda i: (0, 0)),      # VMEM-resident
                ],
                out_specs=pl.BlockSpec((tm, N), lambda i: (i, 0)),
            ),
            compiler_params=pltpu.CompilerParams(
                dimension_semantics=("parallel",)),   # v7x megacore row split
            cost_estimate=cost,
        )(xf, self._M, self._bias_row)

        # (B, P*E) -> (B, P, E) == conv out .flatten(2).transpose(1, 2)
        return y.reshape(B, P, E)

    def __call__(self, x):
        if x.ndim == 5:                       # (B, T, C, H, W): fold T into rows
            B, T = x.shape[:2]
            y = self._embed(x.reshape((B * T,) + x.shape[2:]))
            return y.reshape((B, T) + y.shape[1:])
        return self._embed(x)

    # -------------------- pure-JAX reference (un-collapsed) ------------------

    def reference(self, x):
        """Gather + bilinear + conv math kept un-fused, for correctness checks."""
        if x.ndim == 5:
            B, T = x.shape[:2]
            y = self.reference(x.reshape((B * T,) + x.shape[2:]))
            return y.reshape((B, T) + y.shape[1:])
        hi = jax.lax.Precision.HIGHEST
        xf = x.astype(jnp.float32)
        vals = xf[:, :, self._idx_y, self._idx_x]              # (B, C, 4, P, K)
        cols = jnp.einsum('bcnpk,npk->bpck', vals, self._wbil, precision=hi)
        y = jnp.einsum('bpck,eck->bpe', cols, self._w_conv_r, precision=hi)
        return y + self._b_conv


if __name__ == "__main__":
    B, C, H, W = 2, 3, 16, 16
    key = jax.random.PRNGKey(0)
    kx, kp, kt, kb = jax.random.split(key, 4)
    x = jax.random.normal(kx, (B, C, H, W), dtype=jnp.float32)

    # Default path: bf16 MXU operands (M stored bf16, x cast in-kernel), f32 acc.
    model = TempDeformPatchEmbedPallas(img_size=16, patch_size=4, in_chans=3,
                                       embed_dim=32, is_discrete=False, key=kp)
    out = jax.block_until_ready(model(x))
    assert out.shape == (B, model.num_patches, model.embed_dim), out.shape
    ref = jax.block_until_ready(model.reference(x))
    assert jnp.allclose(out, ref, atol=5e-2, rtol=5e-2), \
        float(jnp.max(jnp.abs(out - ref)))

    # f32 operand path for tight validation.
    model_f32 = TempDeformPatchEmbedPallas(img_size=16, patch_size=4, in_chans=3,
                                           embed_dim=32, is_discrete=False,
                                           use_bf16_operands=False, key=kp)
    out_f32 = jax.block_until_ready(model_f32(x))
    assert jnp.allclose(out_f32, ref, atol=1e-3, rtol=1e-3), \
        float(jnp.max(jnp.abs(out_f32 - ref)))

    # 5-D temporal input: T folded into the matmul row dim (single launch).
    T = 4
    xt = jax.random.normal(kt, (B, T, C, H, W), dtype=jnp.float32)
    out_t = jax.block_until_ready(model(xt))
    ref_t = jax.block_until_ready(model.reference(xt))
    assert out_t.shape == (B, T, model.num_patches, model.embed_dim)
    assert jnp.allclose(out_t, ref_t, atol=5e-2, rtol=5e-2)

    # Ragged-batch case: rows not a multiple of the row tile -> Pallas masks the
    # edge block (no wrapper pad/slice passes over HBM).
    Bb = 137
    xb = jax.random.normal(kb, (Bb, C, H, W), dtype=jnp.float32)
    out_b = jax.block_until_ready(model(xb))
    ref_b = jax.block_until_ready(model.reference(xb))
    assert out_b.shape == (Bb, model.num_patches, model.embed_dim)
    assert jnp.allclose(out_b, ref_b, atol=5e-2, rtol=5e-2)

    print("KERNEL_OK")
</pallas_src>

<mosaic_0001>
module attributes {stable_mosaic.version = 11 : i64} {
  func.func @_proj_kernel(%arg0: i32, %arg1: memref<16x768xf32, #tpu.memory_space<vmem>>, %arg2: memref<768x512xbf16, #tpu.memory_space<vmem>>, %arg3: memref<1x512xf32, #tpu.memory_space<vmem>>, %arg4: memref<16x512xf32, #tpu.memory_space<vmem>>) attributes {dimension_semantics = [#tpu.dimension_semantics<parallel>], iteration_bounds = array<i64: 1>, scalar_prefetch = 0 : i64, scratch_operands = 0 : i64, tpu.core_type = #tpu.core_type<tc>, window_params = [{transform_indices = @transform_0, window_bounds = array<i64: 16, 768>}, {pipeline_mode = #tpu.pipeline_mode<synchronous>, transform_indices = @transform_1, window_bounds = array<i64: 768, 512>}, {pipeline_mode = #tpu.pipeline_mode<synchronous>, transform_indices = @transform_2, window_bounds = array<i64: 1, 512>}, {transform_indices = @transform_3, window_bounds = array<i64: 16, 512>}]} {
    %c0 = arith.constant 0 : index
    %c0_0 = arith.constant 0 : index
    %0 = vector.load %arg1[%c0, %c0_0] : memref<16x768xf32, #tpu.memory_space<vmem>>, vector<16x768xf32>
    %1 = arith.truncf %0 : vector<16x768xf32> to vector<16x768xbf16>
    %c0_1 = arith.constant 0 : index
    %c0_2 = arith.constant 0 : index
    %2 = vector.load %arg2[%c0_1, %c0_2] : memref<768x512xbf16, #tpu.memory_space<vmem>>, vector<768x512xbf16>
    %cst = arith.constant dense<0.000000e+00> : vector<16x512xf32>
    %3 = tpu.matmul %1, %2, %cst {dimension_numbers = #tpu.dot_dimension_numbers<[1], [0], [0], [1], [0, 0, 1, 1], [], []>} : vector<16x768xbf16>, vector<768x512xbf16>, vector<16x512xf32> -> vector<16x512xf32>
    %c0_3 = arith.constant 0 : index
    %c0_4 = arith.constant 0 : index
    %4 = vector.load %arg3[%c0_3, %c0_4] : memref<1x512xf32, #tpu.memory_space<vmem>>, vector<1x512xf32>
    %5 = vector.broadcast %4 : vector<1x512xf32> to vector<16x512xf32>
    %6 = arith.addf %3, %5 : vector<16x512xf32>
    %c0_5 = arith.constant 0 : index
    %c0_6 = arith.constant 0 : index
    %7 = vector.load %arg4[%c0_5, %c0_6] : memref<16x512xf32, #tpu.memory_space<vmem>>, vector<16x512xf32>
    tpu.vector_store %arg4[%c0_5, %c0_6], %6 {strides = array<i32>} : memref<16x512xf32, #tpu.memory_space<vmem>>, vector<16x512xf32>,
    return
  }
  func.func @transform_0(%arg0: i32) -> (i32, i32) {
    %c0_i32 = arith.constant 0 : i32
    %c0_i32_0 = arith.constant 0 : i32
    return %arg0, %c0_i32 : i32, i32
  }
  func.func @transform_1(%arg0: i32) -> (i32, i32) {
    %c0_i32 = arith.constant 0 : i32
    %c0_i32_0 = arith.constant 0 : i32
    %c0_i32_1 = arith.constant 0 : i32
    return %c0_i32, %c0_i32_0 : i32, i32
  }
  func.func @transform_2(%arg0: i32) -> (i32, i32) {
    %c0_i32 = arith.constant 0 : i32
    %c0_i32_0 = arith.constant 0 : i32
    %c0_i32_1 = arith.constant 0 : i32
    return %c0_i32, %c0_i32_0 : i32, i32
  }
  func.func @transform_3(%arg0: i32) -> (i32, i32) {
    %c0_i32 = arith.constant 0 : i32
    %c0_i32_0 = arith.constant 0 : i32
    return %arg0, %c0_i32 : i32, i32
  }
}

</mosaic_0001>

<llo_original>
// kernel: tpu_custom_call.1
$region0: #{tpu_custom_call.1}
  #allocation0 [shape = 'u32[]', space=smem, size = 0x4, offset = 0x4, fixed_abs, tag = 'smem constant byte address 0x4 - core index']
  #allocation1 [shape = 'u32[144,128]{1,0:T(1,128)}', space=vmem, size = 0x12000, scoped, tag = 'internal scratch']
  %s0 = inlined_call_operand.hbm [shape: f32[2,768], index: 0, kind: input, shape index: {}]
  %s1 = inlined_call_operand.hbm [shape: bf16[768,512], index: 1, kind: input, shape index: {}]
  %s2 = inlined_call_operand.vmem [shape: f32[1,512], index: 2, kind: input, shape index: {}]
  %s3 = inlined_call_operand.hbm [shape: f32[2,512], index: 3, kind: output, shape index: {}]
  %s4 = sld [smem:[#allocation0]]
  $region30: #{tpu_custom_call.1} parent=0
    _
  %s6 = ssub.s32 1, %s4
  %s7 = scalar_select 0, %s6, %s4
  $region1: #{tpu_custom_call.1} parent=0
    #allocation2 [shape = 'u8[49152]{0}', space=vmem, size = 0xc000, scoped, tag = 'input window, operand 0, single buffered']
    #allocation3 [shape = 's32[1]{0}', space=sflag, size = 0x4, scoped, tag = 'scoped memory for tpu_custom_call.1']
    #allocation4 [shape = 's32[1]{0}', space=sflag, size = 0x4, scoped, tag = 'scoped memory for tpu_custom_call.1']
    #allocation5 [shape = 'u8[786432]{0}', space=vmem, size = 0xc0000, scoped, tag = 'input window, operand 1, single buffered']
    #allocation6 [shape = 's32[1]{0}', space=sflag, size = 0x4, scoped, tag = 'scoped memory for tpu_custom_call.1']
    #allocation7 [shape = 'u8[32768]{0}', space=vmem, size = 0x8000, scoped, tag = 'output window, operand 0, single buffered']
    %8 = vsyncpa [#allocation3], 0
    %9 = vsyncpa [#allocation6], 0
    %10 = vsyncpa [#allocation4], 0
    // Predicated region
    $region2: #{tpu_custom_call.1} parent=1 // pred_check
      _
    $region3: #{tpu_custom_call.1} parent=1 // pred_check_branch
      %12 = sbr.rel (0) target = $region5
    $region4: #{tpu_custom_call.1} parent=1 // pred_region
      %s14 = ssub.s32 1536, 192
      %15 = vsyncadd [#allocation3], %s14
      %s16 = sshll.u32 [#allocation2], 4
      %s17 = int_to_ptr.vmem [resolvable:$true] %s16
      %22 = dma.hbm_to_vmem [thread:$0]  %s0, 192, %s17, [#allocation3], 192, 192, 12
    $region5: #{tpu_custom_call.1} parent=1 // pred_fallthru
      _
    // Predicated region
    $region6: #{tpu_custom_call.1} parent=1 // pred_check
      _
    $region7: #{tpu_custom_call.1} parent=1 // pred_check_branch
      %24 = sbr.rel (0) target = $region9
    $region8: #{tpu_custom_call.1} parent=1 // pred_region
      %s26 = ssub.s32 24576, 24576
      %27 = vsyncadd [#allocation6], %s26
      %s28 = sshll.u32 [#allocation5], 4
      %s29 = int_to_ptr.vmem [resolvable:$true] %s28
      %34 = dma.hbm_to_vmem [thread:$0]  %s1, 24576, %s29, [#allocation6], 256, 256, 16
    $region9: #{tpu_custom_call.1} parent=1 // pred_fallthru
      _
    // Predicated region
    $region10: #{tpu_custom_call.1} parent=1 // pred_check
      _
    $region11: #{tpu_custom_call.1} parent=1 // pred_check_branch
      %36 = sbr.rel (0) target = $region13
    $region12: #{tpu_custom_call.1} parent=1 // pred_region
      _
    $region13: #{tpu_custom_call.1} parent=1 // pred_fallthru
      _
    // Predicated region
    $region14: #{tpu_custom_call.1} parent=1 // pred_check
      _
    $region15: #{tpu_custom_call.1} parent=1 // pred_check_branch
      %38 = sbr.rel (0) target = $region17
    $region16: #{tpu_custom_call.1} parent=1 // pred_region
      %39 = dma.done [#allocation3], 1536
    $region17: #{tpu_custom_call.1} parent=1 // pred_fallthru
      _
    // Predicated region
    $region18: #{tpu_custom_call.1} parent=1 // pred_check
      _
    $region19: #{tpu_custom_call.1} parent=1 // pred_check_branch
      %41 = sbr.rel (0) target = $region21
    $region20: #{tpu_custom_call.1} parent=1 // pred_region
      %42 = dma.done [#allocation6], 24576
    $region21: #{tpu_custom_call.1} parent=1 // pred_fallthru
      _
    %v43 = vld [vmem:[#allocation2] sm:$0xff]
    %v44 = vld [vmem:[#allocation2 + $0x8] sm:$0xf]
    %v45 = vld [vmem:[#allocation2 + $0xc] sm:$0xff]
    %v46 = vld [vmem:[#allocation2 + $0x14] sm:$0xf]
    %v47 = vld [vmem:[#allocation2 + $0x18] sm:$0xff]
    %v48 = vld [vmem:[#allocation2 + $0x20] sm:$0xf]
    %v49 = vld [vmem:[#allocation2 + $0x24] sm:$0xff]
    %v50 = vld [vmem:[#allocation2 + $0x2c] sm:$0xf]
    %v51 = vld [vmem:[#allocation2 + $0x30] sm:$0xff]
    %v52 = vld [vmem:[#allocation2 + $0x38] sm:$0xf]
    %v53 = vld [vmem:[#allocation2 + $0x3c] sm:$0xff]
    %v54 = vld [vmem:[#allocation2 + $0x44] sm:$0xf]
    %v55 = vld [vmem:[#allocation2 + $0x48] sm:$0xff]
    %v56 = vld [vmem:[#allocation2 + $0x50] sm:$0xf]
    %v57 = vld [vmem:[#allocation2 + $0x54] sm:$0xff]
    %v58 = vld [vmem:[#allocation2 + $0x5c] sm:$0xf]
    %v75 = vcombine.low %v43, %v45
    %v76 = vcombine.high %v43, %v45
    %v77 = vcombine.low %v47, %v49
    %v78 = vcombine.high %v47, %v49
    %v80 = vunpack.c.l.s4 1983009808
    %v81 = vunpack.c.0.s8 %v80
    %v82 = vlaneseq
    %v83 = vshrl.u32 %v82, 7
    %v84 = vsub.s32 %v81, %v83
    %v85 = vrot.slane %v75, %v84
    %v87 = vunpack.c.l.s4 1983009808
    %v88 = vunpack.c.0.s8 %v87
    %v89 = vlaneseq
    %v90 = vshrl.u32 %v89, 7
    %v91 = vsub.s32 %v88, %v90
    %v92 = vrot.slane %v76, %v91
    %v94 = vunpack.c.l.s4 1983009808
    %v95 = vunpack.c.0.s8 %v94
    %v96 = vlaneseq
    %v97 = vshrl.u32 %v96, 7
    %v98 = vsub.s32 %v95, %v97
    %v99 = vrot.slane %v77, %v98
    %v101 = vunpack.c.l.s4 1983009808
    %v102 = vunpack.c.0.s8 %v101
    %v103 = vlaneseq
    %v104 = vshrl.u32 %v103, 7
    %v105 = vsub.s32 %v102, %v104
    %v106 = vrot.slane %v78, %v105
    %v107 = vcombine.low %v85, %v99
    %v108 = vcombine.high %v85, %v99
    %v109 = vcombine.low %v92, %v106
    %v110 = vcombine.high %v92, %v106
    %v111 = vcombine.low %v44, %v46
    %v112 = vcombine.low %v48, %v50
    %v114 = vunpack.c.l.s4 1983009808
    %v115 = vunpack.c.0.s8 %v114
    %v116 = vlaneseq
    %v117 = vshrl.u32 %v116, 7
    %v118 = vsub.s32 %v115, %v117
    %v119 = vrot.slane %v111, %v118
    %v121 = vunpack.c.l.s4 1983009808
    %v122 = vunpack.c.0.s8 %v121
    %v123 = vlaneseq
    %v124 = vshrl.u32 %v123, 7
    %v125 = vsub.s32 %v122, %v124
    %v126 = vrot.slane %v112, %v125
    %v127 = vcombine.low %v119, %v126
    %v128 = vcombine.high %v119, %v126
    %v129 = vcombine.low %v51, %v53
    %v130 = vcombine.high %v51, %v53
    %v131 = vcombine.low %v55, %v57
    %v132 = vcombine.high %v55, %v57
    %v134 = vunpack.c.l.s4 1983009808
    %v135 = vunpack.c.0.s8 %v134
    %v136 = vlaneseq
    %v137 = vshrl.u32 %v136, 7
    %v138 = vsub.s32 %v135, %v137
    %v139 = vrot.slane %v129, %v138
    %v141 = vunpack.c.l.s4 1983009808
    %v142 = vunpack.c.0.s8 %v141
    %v143 = vlaneseq
    %v144 = vshrl.u32 %v143, 7
    %v145 = vsub.s32 %v142, %v144
    %v146 = vrot.slane %v130, %v145
    %v148 = vunpack.c.l.s4 1983009808
    %v149 = vunpack.c.0.s8 %v148
    %v150 = vlaneseq
    %v151 = vshrl.u32 %v150, 7
    %v152 = vsub.s32 %v149, %v151
    %v153 = vrot.slane %v131, %v152
    %v155 = vunpack.c.l.s4 1983009808
    %v156 = vunpack.c.0.s8 %v155
    %v157 = vlaneseq
    %v158 = vshrl.u32 %v157, 7
    %v159 = vsub.s32 %v156, %v158
    %v160 = vrot.slane %v132, %v159
    %v161 = vcombine.low %v139, %v153
    %v162 = vcombine.high %v139, %v153
    %v163 = vcombine.low %v146, %v160
    %v164 = vcombine.high %v146, %v160
    %v165 = vcombine.low %v52, %v54
    %v166 = vcombine.low %v56, %v58
    %v168 = vunpack.c.l.s4 1983009808
    %v169 = vunpack.c.0.s8 %v168
    %v170 = vlaneseq
    %v171 = vshrl.u32 %v170, 7
    %v172 = vsub.s32 %v169, %v171
    %v173 = vrot.slane %v165, %v172
    %v175 = vunpack.c.l.s4 1983009808
    %v176 = vunpack.c.0.s8 %v175
    %v177 = vlaneseq
    %v178 = vshrl.u32 %v177, 7
    %v179 = vsub.s32 %v176, %v178
    %v180 = vrot.slane %v166, %v179
    %v181 = vcombine.low %v173, %v180
    %v182 = vcombine.high %v173, %v180
    %v195 = vpack.c.bf16 %v161, %v107
    %v196 = vpack.c.bf16 %v162, %v108
    %v197 = vpack.c.bf16 %v163, %v109
    %v198 = vpack.c.bf16 %v164, %v110
    %v199 = vpack.c.bf16 %v181, %v127
    %v200 = vpack.c.bf16 %v182, %v128
    %v201 = vld [vmem:[#allocation5] sm:$0xff]
    %v202 = vld [vmem:[#allocation5 + $0x8] sm:$0xff]
    %v203 = vld [vmem:[#allocation5 + $0x10] sm:$0xff]
    %v204 = vld [vmem:[#allocation5 + $0x18] sm:$0xff]
    %v205 = vld [vmem:[#allocation5 + $0x20] sm:$0xff]
    %v206 = vld [vmem:[#allocation5 + $0x28] sm:$0xff]
    %v207 = vld [vmem:[#allocation5 + $0x30] sm:$0xff]
    %v208 = vld [vmem:[#allocation5 + $0x38] sm:$0xff]
    %v209 = vld [vmem:[#allocation5 + $0x40] sm:$0xff]
    %v210 = vld [vmem:[#allocation5 + $0x48] sm:$0xff]
    %v211 = vld [vmem:[#allocation5 + $0x50] sm:$0xff]
    %v212 = vld [vmem:[#allocation5 + $0x58] sm:$0xff]
    %v213 = vld [vmem:[#allocation5 + $0x60] sm:$0xff]
    %v214 = vld [vmem:[#allocation5 + $0x68] sm:$0xff]
    %v215 = vld [vmem:[#allocation5 + $0x70] sm:$0xff]
    %v216 = vld [vmem:[#allocation5 + $0x78] sm:$0xff]
    %v217 = vld [vmem:[#allocation5 + $0x80] sm:$0xff]
    %v218 = vld [vmem:[#allocation5 + $0x88] sm:$0xff]
    %v219 = vld [vmem:[#allocation5 + $0x90] sm:$0xff]
    %v220 = vld [vmem:[#allocation5 + $0x98] sm:$0xff]
    %v221 = vld [vmem:[#allocation5 + $0xa0] sm:$0xff]
    %v222 = vld [vmem:[#allocation5 + $0xa8] sm:$0xff]
    %v223 = vld [vmem:[#allocation5 + $0xb0] sm:$0xff]
    %v224 = vld [vmem:[#allocation5 + $0xb8] sm:$0xff]
    %v225 = vld [vmem:[#allocation5 + $0xc0] sm:$0xff]
    %v226 = vld [vmem:[#allocation5 + $0xc8] sm:$0xff]
    %v227 = vld [vmem:[#allocation5 + $0xd0] sm:$0xff]
    %v228 = vld [vmem:[#allocation5 + $0xd8] sm:$0xff]
    %v229 = vld [vmem:[#allocation5 + $0xe0] sm:$0xff]
    %v230 = vld [vmem:[#allocation5 + $0xe8] sm:$0xff]
    %v231 = vld [vmem:[#allocation5 + $0xf0] sm:$0xff]
    %v232 = vld [vmem:[#allocation5 + $0xf8] sm:$0xff]
    %v233 = vld [vmem:[#allocation5 + $0x100] sm:$0xff]
    %v234 = vld [vmem:[#allocation5 + $0x108] sm:$0xff]
    %v235 = vld [vmem:[#allocation5 + $0x110] sm:$0xff]
    %v236 = vld [vmem:[#allocation5 + $0x118] sm:$0xff]
    %v237 = vld [vmem:[#allocation5 + $0x120] sm:$0xff]
    %v238 = vld [vmem:[#allocation5 + $0x128] sm:$0xff]
    %v239 = vld [vmem:[#allocation5 + $0x130] sm:$0xff]
    %v240 = vld [vmem:[#allocation5 + $0x138] sm:$0xff]
    %v241 = vld [vmem:[#allocation5 + $0x140] sm:$0xff]
    %v242 = vld [vmem:[#allocation5 + $0x148] sm:$0xff]
    %v243 = vld [vmem:[#allocation5 + $0x150] sm:$0xff]
    %v244 = vld [vmem:[#allocation5 + $0x158] sm:$0xff]
    %v245 = vld [vmem:[#allocation5 + $0x160] sm:$0xff]
    %v246 = vld [vmem:[#allocation5 + $0x168] sm:$0xff]
    %v247 = vld [vmem:[#allocation5 + $0x170] sm:$0xff]
    %v248 = vld [vmem:[#allocation5 + $0x178] sm:$0xff]
    %v249 = vld [vmem:[#allocation5 + $0x180] sm:$0xff]
    %v250 = vld [vmem:[#allocation5 + $0x188] sm:$0xff]
    %v251 = vld [vmem:[#allocation5 + $0x190] sm:$0xff]
    %v252 = vld [vmem:[#allocation5 + $0x198] sm:$0xff]
    %v253 = vld [vmem:[#allocation5 + $0x1a0] sm:$0xff]
    %v254 = vld [vmem:[#allocation5 + $0x1a8] sm:$0xff]
    %v255 = vld [vmem:[#allocation5 + $0x1b0] sm:$0xff]
    %v256 = vld [vmem:[#allocation5 + $0x1b8] sm:$0xff]
    %v257 = vld [vmem:[#allocation5 + $0x1c0] sm:$0xff]
    %v258 = vld [vmem:[#allocation5 + $0x1c8] sm:$0xff]
    %v259 = vld [vmem:[#allocation5 + $0x1d0] sm:$0xff]
    %v260 = vld [vmem:[#allocation5 + $0x1d8] sm:$0xff]
    %v261 = vld [vmem:[#allocation5 + $0x1e0] sm:$0xff]
    %v262 = vld [vmem:[#allocation5 + $0x1e8] sm:$0xff]
    %v263 = vld [vmem:[#allocation5 + $0x1f0] sm:$0xff]
    %v264 = vld [vmem:[#allocation5 + $0x1f8] sm:$0xff]
    %v265 = vld [vmem:[#allocation5 + $0x200] sm:$0xff]
    %v266 = vld [vmem:[#allocation5 + $0x208] sm:$0xff]
    %v267 = vld [vmem:[#allocation5 + $0x210] sm:$0xff]
    %v268 = vld [vmem:[#allocation5 + $0x218] sm:$0xff]
    %v269 = vld [vmem:[#allocation5 + $0x220] sm:$0xff]
    %v270 = vld [vmem:[#allocation5 + $0x228] sm:$0xff]
    %v271 = vld [vmem:[#allocation5 + $0x230] sm:$0xff]
    %v272 = vld [vmem:[#allocation5 + $0x238] sm:$0xff]
    %v273 = vld [vmem:[#allocation5 + $0x240] sm:$0xff]
    %v274 = vld [vmem:[#allocation5 + $0x248] sm:$0xff]
    %v275 = vld [vmem:[#allocation5 + $0x250] sm:$0xff]
    %v276 = vld [vmem:[#allocation5 + $0x258] sm:$0xff]
    %v277 = vld [vmem:[#allocation5 + $0x260] sm:$0xff]
    %v278 = vld [vmem:[#allocation5 + $0x268] sm:$0xff]
    %v279 = vld [vmem:[#allocation5 + $0x270] sm:$0xff]
    %v280 = vld [vmem:[#allocation5 + $0x278] sm:$0xff]
    %v281 = vld [vmem:[#allocation5 + $0x280] sm:$0xff]
    %v282 = vld [vmem:[#allocation5 + $0x288] sm:$0xff]
    %v283 = vld [vmem:[#allocation5 + $0x290] sm:$0xff]
    %v284 = vld [vmem:[#allocation5 + $0x298] sm:$0xff]
    %v285 = vld [vmem:[#allocation5 + $0x2a0] sm:$0xff]
    %v286 = vld [vmem:[#allocation5 + $0x2a8] sm:$0xff]
    %v287 = vld [vmem:[#allocation5 + $0x2b0] sm:$0xff]
    %v288 = vld [vmem:[#allocation5 + $0x2b8] sm:$0xff]
    %v289 = vld [vmem:[#allocation5 + $0x2c0] sm:$0xff]
    %v290 = vld [vmem:[#allocation5 + $0x2c8] sm:$0xff]
    %v291 = vld [vmem:[#allocation5 + $0x2d0] sm:$0xff]
    %v292 = vld [vmem:[#allocation5 + $0x2d8] sm:$0xff]
    %v293 = vld [vmem:[#allocation5 + $0x2e0] sm:$0xff]
    %v294 = vld [vmem:[#allocation5 + $0x2e8] sm:$0xff]
    %v295 = vld [vmem:[#allocation5 + $0x2f0] sm:$0xff]
    %v296 = vld [vmem:[#allocation5 + $0x2f8] sm:$0xff]
    %v297 = vld [vmem:[#allocation5 + $0x300] sm:$0xff]
    %v298 = vld [vmem:[#allocation5 + $0x308] sm:$0xff]
    %v299 = vld [vmem:[#allocation5 + $0x310] sm:$0xff]
    %v300 = vld [vmem:[#allocation5 + $0x318] sm:$0xff]
    %v301 = vld [vmem:[#allocation5 + $0x320] sm:$0xff]
    %v302 = vld [vmem:[#allocation5 + $0x328] sm:$0xff]
    %v303 = vld [vmem:[#allocation5 + $0x330] sm:$0xff]
    %v304 = vld [vmem:[#allocation5 + $0x338] sm:$0xff]
    %v305 = vld [vmem:[#allocation5 + $0x340] sm:$0xff]
    %v306 = vld [vmem:[#allocation5 + $0x348] sm:$0xff]
    %v307 = vld [vmem:[#allocation5 + $0x350] sm:$0xff]
    %v308 = vld [vmem:[#allocation5 + $0x358] sm:$0xff]
    %v309 = vld [vmem:[#allocation5 + $0x360] sm:$0xff]
    %v310 = vld [vmem:[#allocation5 + $0x368] sm:$0xff]
    %v311 = vld [vmem:[#allocation5 + $0x370] sm:$0xff]
    %v312 = vld [vmem:[#allocation5 + $0x378] sm:$0xff]
    %v313 = vld [vmem:[#allocation5 + $0x380] sm:$0xff]
    %v314 = vld [vmem:[#allocation5 + $0x388] sm:$0xff]
    %v315 = vld [vmem:[#allocation5 + $0x390] sm:$0xff]
    %v316 = vld [vmem:[#allocation5 + $0x398] sm:$0xff]
    %v317 = vld [vmem:[#allocation5 + $0x3a0] sm:$0xff]
    %v318 = vld [vmem:[#allocation5 + $0x3a8] sm:$0xff]
    %v319 = vld [vmem:[#allocation5 + $0x3b0] sm:$0xff]
    %v320 = vld [vmem:[#allocation5 + $0x3b8] sm:$0xff]
    %v321 = vld [vmem:[#allocation5 + $0x3c0] sm:$0xff]
    %v322 = vld [vmem:[#allocation5 + $0x3c8] sm:$0xff]
    %v323 = vld [vmem:[#allocation5 + $0x3d0] sm:$0xff]
    %v324 = vld [vmem:[#allocation5 + $0x3d8] sm:$0xff]
    %v325 = vld [vmem:[#allocation5 + $0x3e0] sm:$0xff]
    %v326 = vld [vmem:[#allocation5 + $0x3e8] sm:$0xff]
    %v327 = vld [vmem:[#allocation5 + $0x3f0] sm:$0xff]
    %v328 = vld [vmem:[#allocation5 + $0x3f8] sm:$0xff]
    %v329 = vld [vmem:[#allocation5 + $0x400] sm:$0xff]
    %v330 = vld [vmem:[#allocation5 + $0x408] sm:$0xff]
    %v331 = vld [vmem:[#allocation5 + $0x410] sm:$0xff]
    %v332 = vld [vmem:[#allocation5 + $0x418] sm:$0xff]
    %v333 = vld [vmem:[#allocation5 + $0x420] sm:$0xff]
    %v334 = vld [vmem:[#allocation5 + $0x428] sm:$0xff]
    %v335 = vld [vmem:[#allocation5 + $0x430] sm:$0xff]
    %v336 = vld [vmem:[#allocation5 + $0x438] sm:$0xff]
    %v337 = vld [vmem:[#allocation5 + $0x440] sm:$0xff]
    %v338 = vld [vmem:[#allocation5 + $0x448] sm:$0xff]
    %v339 = vld [vmem:[#allocation5 + $0x450] sm:$0xff]
    %v340 = vld [vmem:[#allocation5 + $0x458] sm:$0xff]
    %v341 = vld [vmem:[#allocation5 + $0x460] sm:$0xff]
    %v342 = vld [vmem:[#allocation5 + $0x468] sm:$0xff]
    %v343 = vld [vmem:[#allocation5 + $0x470] sm:$0xff]
    %v344 = vld [vmem:[#allocation5 + $0x478] sm:$0xff]
    %v345 = vld [vmem:[#allocation5 + $0x480] sm:$0xff]
    %v346 = vld [vmem:[#allocation5 + $0x488] sm:$0xff]
    %v347 = vld [vmem:[#allocation5 + $0x490] sm:$0xff]
    %v348 = vld [vmem:[#allocation5 + $0x498] sm:$0xff]
    %v349 = vld [vmem:[#allocation5 + $0x4a0] sm:$0xff]
    %v350 = vld [vmem:[#allocation5 + $0x4a8] sm:$0xff]
    %v351 = vld [vmem:[#allocation5 + $0x4b0] sm:$0xff]
    %v352 = vld [vmem:[#allocation5 + $0x4b8] sm:$0xff]
    %v353 = vld [vmem:[#allocation5 + $0x4c0] sm:$0xff]
    %v354 = vld [vmem:[#allocation5 + $0x4c8] sm:$0xff]
    %v355 = vld [vmem:[#allocation5 + $0x4d0] sm:$0xff]
    %v356 = vld [vmem:[#allocation5 + $0x4d8] sm:$0xff]
    %v357 = vld [vmem:[#allocation5 + $0x4e0] sm:$0xff]
    %v358 = vld [vmem:[#allocation5 + $0x4e8] sm:$0xff]
    %v359 = vld [vmem:[#allocation5 + $0x4f0] sm:$0xff]
    %v360 = vld [vmem:[#allocation5 + $0x4f8] sm:$0xff]
    %v361 = vld [vmem:[#allocation5 + $0x500] sm:$0xff]
    %v362 = vld [vmem:[#allocation5 + $0x508] sm:$0xff]
    %v363 = vld [vmem:[#allocation5 + $0x510] sm:$0xff]
    %v364 = vld [vmem:[#allocation5 + $0x518] sm:$0xff]
    %v365 = vld [vmem:[#allocation5 + $0x520] sm:$0xff]
    %v366 = vld [vmem:[#allocation5 + $0x528] sm:$0xff]
    %v367 = vld [vmem:[#allocation5 + $0x530] sm:$0xff]
    %v368 = vld [vmem:[#allocation5 + $0x538] sm:$0xff]
    %v369 = vld [vmem:[#allocation5 + $0x540] sm:$0xff]
    %v370 = vld [vmem:[#allocation5 + $0x548] sm:$0xff]
    %v371 = vld [vmem:[#allocation5 + $0x550] sm:$0xff]
    %v372 = vld [vmem:[#allocation5 + $0x558] sm:$0xff]
    %v373 = vld [vmem:[#allocation5 + $0x560] sm:$0xff]
    %v374 = vld [vmem:[#allocation5 + $0x568] sm:$0xff]
    %v375 = vld [vmem:[#allocation5 + $0x570] sm:$0xff]
    %v376 = vld [vmem:[#allocation5 + $0x578] sm:$0xff]
    %v377 = vld [vmem:[#allocation5 + $0x580] sm:$0xff]
    %v378 = vld [vmem:[#allocation5 + $0x588] sm:$0xff]
    %v379 = vld [vmem:[#allocation5 + $0x590] sm:$0xff]
    %v380 = vld [vmem:[#allocation5 + $0x598] sm:$0xff]
    %v381 = vld [vmem:[#allocation5 + $0x5a0] sm:$0xff]
    %v382 = vld [vmem:[#allocation5 + $0x5a8] sm:$0xff]
    %v383 = vld [vmem:[#allocation5 + $0x5b0] sm:$0xff]
    %v384 = vld [vmem:[#allocation5 + $0x5b8] sm:$0xff]
    %v385 = vld [vmem:[#allocation5 + $0x5c0] sm:$0xff]
    %v386 = vld [vmem:[#allocation5 + $0x5c8] sm:$0xff]
    %v387 = vld [vmem:[#allocation5 + $0x5d0] sm:$0xff]
    %v388 = vld [vmem:[#allocation5 + $0x5d8] sm:$0xff]
    %v389 = vld [vmem:[#allocation5 + $0x5e0] sm:$0xff]
    %v390 = vld [vmem:[#allocation5 + $0x5e8] sm:$0xff]
    %v391 = vld [vmem:[#allocation5 + $0x5f0] sm:$0xff]
    %v392 = vld [vmem:[#allocation5 + $0x5f8] sm:$0xff]
    %v393 = vld [vmem:[%s2] sm:$0xf]
    %v395 = vlaneseq
    %v396 = vshrl.u32 %v395, 7
    %v397 = vsub.s32 0, %v396
    %v398 = vrot.slane %v393, %v397
    %v399 = vlaneseq
    %v400 = vshrl.u32 %v399, 7
    %v401 = vsub.s32 1, %v400
    %v402 = vrot.slane %v393, %v401
    %v403 = vlaneseq
    %v404 = vshrl.u32 %v403, 7
    %v405 = vsub.s32 2, %v404
    %v406 = vrot.slane %v393, %v405
    %v407 = vlaneseq
    %v408 = vshrl.u32 %v407, 7
    %v409 = vsub.s32 3, %v408
    %v410 = vrot.slane %v393, %v409
    %v607 = vunpack.c.l.b16 %v201
    %v608 = vunpack.c.h.b16 %v201
    %v609 = vunpack.c.l.b16 %v202
    %v610 = vunpack.c.h.b16 %v202
    %v611 = vunpack.c.l.b16 %v203
    %v612 = vunpack.c.h.b16 %v203
    %v613 = vunpack.c.l.b16 %v204
    %v614 = vunpack.c.h.b16 %v204
    %v615 = vunpack.c.l.b16 %v205
    %v616 = vunpack.c.h.b16 %v205
    %v617 = vunpack.c.l.b16 %v206
    %v618 = vunpack.c.h.b16 %v206
    %v619 = vunpack.c.l.b16 %v207
    %v620 = vunpack.c.h.b16 %v207
    %v621 = vunpack.c.l.b16 %v208
    %v622 = vunpack.c.h.b16 %v208
    %v623 = vunpack.c.l.b16 %v209
    %v624 = vunpack.c.h.b16 %v209
    %v625 = vunpack.c.l.b16 %v210
    %v626 = vunpack.c.h.b16 %v210
    %v627 = vunpack.c.l.b16 %v211
    %v628 = vunpack.c.h.b16 %v211
    %v629 = vunpack.c.l.b16 %v212
    %v630 = vunpack.c.h.b16 %v212
    %v631 = vunpack.c.l.b16 %v213
    %v632 = vunpack.c.h.b16 %v213
    %v633 = vunpack.c.l.b16 %v214
    %v634 = vunpack.c.h.b16 %v214
    %v635 = vunpack.c.l.b16 %v215
    %v636 = vunpack.c.h.b16 %v215
    %v637 = vunpack.c.l.b16 %v216
    %v638 = vunpack.c.h.b16 %v216
    %v639 = vunpack.c.l.b16 %v217
    %v640 = vunpack.c.h.b16 %v217
    %v641 = vunpack.c.l.b16 %v218
    %v642 = vunpack.c.h.b16 %v218
    %v643 = vunpack.c.l.b16 %v219
    %v644 = vunpack.c.h.b16 %v219
    %v645 = vunpack.c.l.b16 %v220
    %v646 = vunpack.c.h.b16 %v220
    %v647 = vunpack.c.l.b16 %v221
    %v648 = vunpack.c.h.b16 %v221
    %v649 = vunpack.c.l.b16 %v222
    %v650 = vunpack.c.h.b16 %v222
    %v651 = vunpack.c.l.b16 %v223
    %v652 = vunpack.c.h.b16 %v223
    %v653 = vunpack.c.l.b16 %v224
    %v654 = vunpack.c.h.b16 %v224
    %v655 = vunpack.c.l.b16 %v225
    %v656 = vunpack.c.h.b16 %v225
    %v657 = vunpack.c.l.b16 %v226
    %v658 = vunpack.c.h.b16 %v226
    %v659 = vunpack.c.l.b16 %v227
    %v660 = vunpack.c.h.b16 %v227
    %v661 = vunpack.c.l.b16 %v228
    %v662 = vunpack.c.h.b16 %v228
    %v663 = vunpack.c.l.b16 %v229
    %v664 = vunpack.c.h.b16 %v229
    %v665 = vunpack.c.l.b16 %v230
    %v666 = vunpack.c.h.b16 %v230
    %v667 = vunpack.c.l.b16 %v231
    %v668 = vunpack.c.h.b16 %v231
    %v669 = vunpack.c.l.b16 %v232
    %v670 = vunpack.c.h.b16 %v232
    %v671 = vunpack.c.l.b16 %v233
    %v672 = vunpack.c.h.b16 %v233
    %v673 = vunpack.c.l.b16 %v234
    %v674 = vunpack.c.h.b16 %v234
    %v675 = vunpack.c.l.b16 %v235
    %v676 = vunpack.c.h.b16 %v235
    %v677 = vunpack.c.l.b16 %v236
    %v678 = vunpack.c.h.b16 %v236
    %v679 = vunpack.c.l.b16 %v237
    %v680 = vunpack.c.h.b16 %v237
    %v681 = vunpack.c.l.b16 %v238
    %v682 = vunpack.c.h.b16 %v238
    %v683 = vunpack.c.l.b16 %v239
    %v684 = vunpack.c.h.b16 %v239
    %v685 = vunpack.c.l.b16 %v240
    %v686 = vunpack.c.h.b16 %v240
    %v687 = vunpack.c.l.b16 %v241
    %v688 = vunpack.c.h.b16 %v241
    %v689 = vunpack.c.l.b16 %v242
    %v690 = vunpack.c.h.b16 %v242
    %v691 = vunpack.c.l.b16 %v243
    %v692 = vunpack.c.h.b16 %v243
    %v693 = vunpack.c.l.b16 %v244
    %v694 = vunpack.c.h.b16 %v244
    %v695 = vunpack.c.l.b16 %v245
    %v696 = vunpack.c.h.b16 %v245
    %v697 = vunpack.c.l.b16 %v246
    %v698 = vunpack.c.h.b16 %v246
    %v699 = vunpack.c.l.b16 %v247
    %v700 = vunpack.c.h.b16 %v247
    %v701 = vunpack.c.l.b16 %v248
    %v702 = vunpack.c.h.b16 %v248
    %v703 = vunpack.c.l.b16 %v249
    %v704 = vunpack.c.h.b16 %v249
    %v705 = vunpack.c.l.b16 %v250
    %v706 = vunpack.c.h.b16 %v250
    %v707 = vunpack.c.l.b16 %v251
    %v708 = vunpack.c.h.b16 %v251
    %v709 = vunpack.c.l.b16 %v252
    %v710 = vunpack.c.h.b16 %v252
    %v711 = vunpack.c.l.b16 %v253
    %v712 = vunpack.c.h.b16 %v253
    %v713 = vunpack.c.l.b16 %v254
    %v714 = vunpack.c.h.b16 %v254
    %v715 = vunpack.c.l.b16 %v255
    %v716 = vunpack.c.h.b16 %v255
    %v717 = vunpack.c.l.b16 %v256
    %v718 = vunpack.c.h.b16 %v256
    %v719 = vunpack.c.l.b16 %v257
    %v720 = vunpack.c.h.b16 %v257
    %v721 = vunpack.c.l.b16 %v258
    %v722 = vunpack.c.h.b16 %v258
    %v723 = vunpack.c.l.b16 %v259
    %v724 = vunpack.c.h.b16 %v259
    %v725 = vunpack.c.l.b16 %v260
    %v726 = vunpack.c.h.b16 %v260
    %v727 = vunpack.c.l.b16 %v261
    %v728 = vunpack.c.h.b16 %v261
    %v729 = vunpack.c.l.b16 %v262
    %v730 = vunpack.c.h.b16 %v262
    %v731 = vunpack.c.l.b16 %v263
    %v732 = vunpack.c.h.b16 %v263
    %v733 = vunpack.c.l.b16 %v264
    %v734 = vunpack.c.h.b16 %v264
    %v735 = vunpack.c.l.b16 %v265
    %v736 = vunpack.c.h.b16 %v265
    %v737 = vunpack.c.l.b16 %v266
    %v738 = vunpack.c.h.b16 %v266
    %v739 = vunpack.c.l.b16 %v267
    %v740 = vunpack.c.h.b16 %v267
    %v741 = vunpack.c.l.b16 %v268
    %v742 = vunpack.c.h.b16 %v268
    %v743 = vunpack.c.l.b16 %v269
    %v744 = vunpack.c.h.b16 %v269
    %v745 = vunpack.c.l.b16 %v270
    %v746 = vunpack.c.h.b16 %v270
    %v747 = vunpack.c.l.b16 %v271
    %v748 = vunpack.c.h.b16 %v271
    %v749 = vunpack.c.l.b16 %v272
    %v750 = vunpack.c.h.b16 %v272
    %v751 = vunpack.c.l.b16 %v273
    %v752 = vunpack.c.h.b16 %v273
    %v753 = vunpack.c.l.b16 %v274
    %v754 = vunpack.c.h.b16 %v274
    %v755 = vunpack.c.l.b16 %v275
    %v756 = vunpack.c.h.b16 %v275
    %v757 = vunpack.c.l.b16 %v276
    %v758 = vunpack.c.h.b16 %v276
    %v759 = vunpack.c.l.b16 %v277
    %v760 = vunpack.c.h.b16 %v277
    %v761 = vunpack.c.l.b16 %v278
    %v762 = vunpack.c.h.b16 %v278
    %v763 = vunpack.c.l.b16 %v279
    %v764 = vunpack.c.h.b16 %v279
    %v765 = vunpack.c.l.b16 %v280
    %v766 = vunpack.c.h.b16 %v280
    %v767 = vunpack.c.l.b16 %v281
    %v768 = vunpack.c.h.b16 %v281
    %v769 = vunpack.c.l.b16 %v282
    %v770 = vunpack.c.h.b16 %v282
    %v771 = vunpack.c.l.b16 %v283
    %v772 = vunpack.c.h.b16 %v283
    %v773 = vunpack.c.l.b16 %v284
    %v774 = vunpack.c.h.b16 %v284
    %v775 = vunpack.c.l.b16 %v285
    %v776 = vunpack.c.h.b16 %v285
    %v777 = vunpack.c.l.b16 %v286
    %v778 = vunpack.c.h.b16 %v286
    %v779 = vunpack.c.l.b16 %v287
    %v780 = vunpack.c.h.b16 %v287
    %v781 = vunpack.c.l.b16 %v288
    %v782 = vunpack.c.h.b16 %v288
    %v783 = vunpack.c.l.b16 %v289
    %v784 = vunpack.c.h.b16 %v289
    %v785 = vunpack.c.l.b16 %v290
    %v786 = vunpack.c.h.b16 %v290
    %v787 = vunpack.c.l.b16 %v291
    %v788 = vunpack.c.h.b16 %v291
    %v789 = vunpack.c.l.b16 %v292
    %v790 = vunpack.c.h.b16 %v292
    %v791 = vunpack.c.l.b16 %v293
    %v792 = vunpack.c.h.b16 %v293
    %v793 = vunpack.c.l.b16 %v294
    %v794 = vunpack.c.h.b16 %v294
    %v795 = vunpack.c.l.b16 %v295
    %v796 = vunpack.c.h.b16 %v295
    %v797 = vunpack.c.l.b16 %v296
    %v798 = vunpack.c.h.b16 %v296
    %v799 = vunpack.c.l.b16 %v297
    %v800 = vunpack.c.h.b16 %v297
    %v801 = vunpack.c.l.b16 %v298
    %v802 = vunpack.c.h.b16 %v298
    %v803 = vunpack.c.l.b16 %v299
    %v804 = vunpack.c.h.b16 %v299
    %v805 = vunpack.c.l.b16 %v300
    %v806 = vunpack.c.h.b16 %v300
    %v807 = vunpack.c.l.b16 %v301
    %v808 = vunpack.c.h.b16 %v301
    %v809 = vunpack.c.l.b16 %v302
    %v810 = vunpack.c.h.b16 %v302
    %v811 = vunpack.c.l.b16 %v303
    %v812 = vunpack.c.h.b16 %v303
    %v813 = vunpack.c.l.b16 %v304
    %v814 = vunpack.c.h.b16 %v304
    %v815 = vunpack.c.l.b16 %v305
    %v816 = vunpack.c.h.b16 %v305
    %v817 = vunpack.c.l.b16 %v306
    %v818 = vunpack.c.h.b16 %v306
    %v819 = vunpack.c.l.b16 %v307
    %v820 = vunpack.c.h.b16 %v307
    %v821 = vunpack.c.l.b16 %v308
    %v822 = vunpack.c.h.b16 %v308
    %v823 = vunpack.c.l.b16 %v309
    %v824 = vunpack.c.h.b16 %v309
    %v825 = vunpack.c.l.b16 %v310
    %v826 = vunpack.c.h.b16 %v310
    %v827 = vunpack.c.l.b16 %v311
    %v828 = vunpack.c.h.b16 %v311
    %v829 = vunpack.c.l.b16 %v312
    %v830 = vunpack.c.h.b16 %v312
    %v831 = vunpack.c.l.b16 %v313
    %v832 = vunpack.c.h.b16 %v313
    %v833 = vunpack.c.l.b16 %v314
    %v834 = vunpack.c.h.b16 %v314
    %v835 = vunpack.c.l.b16 %v315
    %v836 = vunpack.c.h.b16 %v315
    %v837 = vunpack.c.l.b16 %v316
    %v838 = vunpack.c.h.b16 %v316
    %v839 = vunpack.c.l.b16 %v317
    %v840 = vunpack.c.h.b16 %v317
    %v841 = vunpack.c.l.b16 %v318
    %v842 = vunpack.c.h.b16 %v318
    %v843 = vunpack.c.l.b16 %v319
    %v844 = vunpack.c.h.b16 %v319
    %v845 = vunpack.c.l.b16 %v320
    %v846 = vunpack.c.h.b16 %v320
    %v847 = vunpack.c.l.b16 %v321
    %v848 = vunpack.c.h.b16 %v321
    %v849 = vunpack.c.l.b16 %v322
    %v850 = vunpack.c.h.b16 %v322
    %v851 = vunpack.c.l.b16 %v323
    %v852 = vunpack.c.h.b16 %v323
    %v853 = vunpack.c.l.b16 %v324
    %v854 = vunpack.c.h.b16 %v324
    %v855 = vunpack.c.l.b16 %v325
    %v856 = vunpack.c.h.b16 %v325
    %v857 = vunpack.c.l.b16 %v326
    %v858 = vunpack.c.h.b16 %v326
    %v859 = vunpack.c.l.b16 %v327
    %v860 = vunpack.c.h.b16 %v327
    %v861 = vunpack.c.l.b16 %v328
    %v862 = vunpack.c.h.b16 %v328
    %v863 = vunpack.c.l.b16 %v329
    %v864 = vunpack.c.h.b16 %v329
    %v865 = vunpack.c.l.b16 %v330
    %v866 = vunpack.c.h.b16 %v330
    %v867 = vunpack.c.l.b16 %v331
    %v868 = vunpack.c.h.b16 %v331
    %v869 = vunpack.c.l.b16 %v332
    %v870 = vunpack.c.h.b16 %v332
    %v871 = vunpack.c.l.b16 %v333
    %v872 = vunpack.c.h.b16 %v333
    %v873 = vunpack.c.l.b16 %v334
    %v874 = vunpack.c.h.b16 %v334
    %v875 = vunpack.c.l.b16 %v335
    %v876 = vunpack.c.h.b16 %v335
    %v877 = vunpack.c.l.b16 %v336
    %v878 = vunpack.c.h.b16 %v336
    %v879 = vunpack.c.l.b16 %v337
    %v880 = vunpack.c.h.b16 %v337
    %v881 = vunpack.c.l.b16 %v338
    %v882 = vunpack.c.h.b16 %v338
    %v883 = vunpack.c.l.b16 %v339
    %v884 = vunpack.c.h.b16 %v339
    %v885 = vunpack.c.l.b16 %v340
    %v886 = vunpack.c.h.b16 %v340
    %v887 = vunpack.c.l.b16 %v341
    %v888 = vunpack.c.h.b16 %v341
    %v889 = vunpack.c.l.b16 %v342
    %v890 = vunpack.c.h.b16 %v342
    %v891 = vunpack.c.l.b16 %v343
    %v892 = vunpack.c.h.b16 %v343
    %v893 = vunpack.c.l.b16 %v344
    %v894 = vunpack.c.h.b16 %v344
    %v895 = vunpack.c.l.b16 %v345
    %v896 = vunpack.c.h.b16 %v345
    %v897 = vunpack.c.l.b16 %v346
    %v898 = vunpack.c.h.b16 %v346
    %v899 = vunpack.c.l.b16 %v347
    %v900 = vunpack.c.h.b16 %v347
    %v901 = vunpack.c.l.b16 %v348
    %v902 = vunpack.c.h.b16 %v348
    %v903 = vunpack.c.l.b16 %v349
    %v904 = vunpack.c.h.b16 %v349
    %v905 = vunpack.c.l.b16 %v350
    %v906 = vunpack.c.h.b16 %v350
    %v907 = vunpack.c.l.b16 %v351
    %v908 = vunpack.c.h.b16 %v351
    %v909 = vunpack.c.l.b16 %v352
    %v910 = vunpack.c.h.b16 %v352
    %v911 = vunpack.c.l.b16 %v353
    %v912 = vunpack.c.h.b16 %v353
    %v913 = vunpack.c.l.b16 %v354
    %v914 = vunpack.c.h.b16 %v354
    %v915 = vunpack.c.l.b16 %v355
    %v916 = vunpack.c.h.b16 %v355
    %v917 = vunpack.c.l.b16 %v356
    %v918 = vunpack.c.h.b16 %v356
    %v919 = vunpack.c.l.b16 %v357
    %v920 = vunpack.c.h.b16 %v357
    %v921 = vunpack.c.l.b16 %v358
    %v922 = vunpack.c.h.b16 %v358
    %v923 = vunpack.c.l.b16 %v359
    %v924 = vunpack.c.h.b16 %v359
    %v925 = vunpack.c.l.b16 %v360
    %v926 = vunpack.c.h.b16 %v360
    %v927 = vunpack.c.l.b16 %v361
    %v928 = vunpack.c.h.b16 %v361
    %v929 = vunpack.c.l.b16 %v362
    %v930 = vunpack.c.h.b16 %v362
    %v931 = vunpack.c.l.b16 %v363
    %v932 = vunpack.c.h.b16 %v363
    %v933 = vunpack.c.l.b16 %v364
    %v934 = vunpack.c.h.b16 %v364
    %v935 = vunpack.c.l.b16 %v365
    %v936 = vunpack.c.h.b16 %v365
    %v937 = vunpack.c.l.b16 %v366
    %v938 = vunpack.c.h.b16 %v366
    %v939 = vunpack.c.l.b16 %v367
    %v940 = vunpack.c.h.b16 %v367
    %v941 = vunpack.c.l.b16 %v368
    %v942 = vunpack.c.h.b16 %v368
    %v943 = vunpack.c.l.b16 %v369
    %v944 = vunpack.c.h.b16 %v369
    %v945 = vunpack.c.l.b16 %v370
    %v946 = vunpack.c.h.b16 %v370
    %v947 = vunpack.c.l.b16 %v371
    %v948 = vunpack.c.h.b16 %v371
    %v949 = vunpack.c.l.b16 %v372
    %v950 = vunpack.c.h.b16 %v372
    %v951 = vunpack.c.l.b16 %v373
    %v952 = vunpack.c.h.b16 %v373
    %v953 = vunpack.c.l.b16 %v374
    %v954 = vunpack.c.h.b16 %v374
    %v955 = vunpack.c.l.b16 %v375
    %v956 = vunpack.c.h.b16 %v375
    %v957 = vunpack.c.l.b16 %v376
    %v958 = vunpack.c.h.b16 %v376
    %v959 = vunpack.c.l.b16 %v377
    %v960 = vunpack.c.h.b16 %v377
    %v961 = vunpack.c.l.b16 %v378
    %v962 = vunpack.c.h.b16 %v378
    %v963 = vunpack.c.l.b16 %v379
    %v964 = vunpack.c.h.b16 %v379
    %v965 = vunpack.c.l.b16 %v380
    %v966 = vunpack.c.h.b16 %v380
    %v967 = vunpack.c.l.b16 %v381
    %v968 = vunpack.c.h.b16 %v381
    %v969 = vunpack.c.l.b16 %v382
    %v970 = vunpack.c.h.b16 %v382
    %v971 = vunpack.c.l.b16 %v383
    %v972 = vunpack.c.h.b16 %v383
    %v973 = vunpack.c.l.b16 %v384
    %v974 = vunpack.c.h.b16 %v384
    %v975 = vunpack.c.l.b16 %v385
    %v976 = vunpack.c.h.b16 %v385
    %v977 = vunpack.c.l.b16 %v386
    %v978 = vunpack.c.h.b16 %v386
    %v979 = vunpack.c.l.b16 %v387
    %v980 = vunpack.c.h.b16 %v387
    %v981 = vunpack.c.l.b16 %v388
    %v982 = vunpack.c.h.b16 %v388
    %v983 = vunpack.c.l.b16 %v389
    %v984 = vunpack.c.h.b16 %v389
    %v985 = vunpack.c.l.b16 %v390
    %v986 = vunpack.c.h.b16 %v390
    %v987 = vunpack.c.l.b16 %v391
    %v988 = vunpack.c.h.b16 %v391
    %v989 = vunpack.c.l.b16 %v392
    %v990 = vunpack.c.h.b16 %v392
    %v991 = vpack.c.b16 %v611, %v607
    %v992 = vpack.c.b16 %v612, %v608
    %v993 = vpack.c.b16 %v613, %v609
    %v994 = vpack.c.b16 %v614, %v610
    %v995 = vpack.c.b16 %v619, %v615
    %v996 = vpack.c.b16 %v620, %v616
    %v997 = vpack.c.b16 %v621, %v617
    %v998 = vpack.c.b16 %v622, %v618
    %v999 = vpack.c.b16 %v627, %v623
    %v1000 = vpack.c.b16 %v628, %v624
    %v1001 = vpack.c.b16 %v629, %v625
    %v1002 = vpack.c.b16 %v630, %v626
    %v1003 = vpack.c.b16 %v635, %v631
    %v1004 = vpack.c.b16 %v636, %v632
    %v1005 = vpack.c.b16 %v637, %v633
    %v1006 = vpack.c.b16 %v638, %v634
    %v1007 = vpack.c.b16 %v643, %v639
    %v1008 = vpack.c.b16 %v644, %v640
    %v1009 = vpack.c.b16 %v645, %v641
    %v1010 = vpack.c.b16 %v646, %v642
    %v1011 = vpack.c.b16 %v651, %v647
    %v1012 = vpack.c.b16 %v652, %v648
    %v1013 = vpack.c.b16 %v653, %v649
    %v1014 = vpack.c.b16 %v654, %v650
    %v1015 = vpack.c.b16 %v659, %v655
    %v1016 = vpack.c.b16 %v660, %v656
    %v1017 = vpack.c.b16 %v661, %v657
    %v1018 = vpack.c.b16 %v662, %v658
    %v1019 = vpack.c.b16 %v667, %v663
    %v1020 = vpack.c.b16 %v668, %v664
    %v1021 = vpack.c.b16 %v669, %v665
    %v1022 = vpack.c.b16 %v670, %v666
    %v1023 = vpack.c.b16 %v675, %v671
    %v1024 = vpack.c.b16 %v676, %v672
    %v1025 = vpack.c.b16 %v677, %v673
    %v1026 = vpack.c.b16 %v678, %v674
    %v1027 = vpack.c.b16 %v683, %v679
    %v1028 = vpack.c.b16 %v684, %v680
    %v1029 = vpack.c.b16 %v685, %v681
    %v1030 = vpack.c.b16 %v686, %v682
    %v1031 = vpack.c.b16 %v691, %v687
    %v1032 = vpack.c.b16 %v692, %v688
    %v1033 = vpack.c.b16 %v693, %v689
    %v1034 = vpack.c.b16 %v694, %v690
    %v1035 = vpack.c.b16 %v699, %v695
    %v1036 = vpack.c.b16 %v700, %v696
    %v1037 = vpack.c.b16 %v701, %v697
    %v1038 = vpack.c.b16 %v702, %v698
    %v1039 = vpack.c.b16 %v707, %v703
    %v1040 = vpack.c.b16 %v708, %v704
    %v1041 = vpack.c.b16 %v709, %v705
    %v1042 = vpack.c.b16 %v710, %v706
    %v1043 = vpack.c.b16 %v715, %v711
    %v1044 = vpack.c.b16 %v716, %v712
    %v1045 = vpack.c.b16 %v717, %v713
    %v1046 = vpack.c.b16 %v718, %v714
    %v1047 = vpack.c.b16 %v723, %v719
    %v1048 = vpack.c.b16 %v724, %v720
    %v1049 = vpack.c.b16 %v725, %v721
    %v1050 = vpack.c.b16 %v726, %v722
    %v1051 = vpack.c.b16 %v731, %v727
    %v1052 = vpack.c.b16 %v732, %v728
    %v1053 = vpack.c.b16 %v733, %v729
    %v1054 = vpack.c.b16 %v734, %v730
    %v1055 = vpack.c.b16 %v739, %v735
    %v1056 = vpack.c.b16 %v740, %v736
    %v1057 = vpack.c.b16 %v741, %v737
    %v1058 = vpack.c.b16 %v742, %v738
    %v1059 = vpack.c.b16 %v747, %v743
    %v1060 = vpack.c.b16 %v748, %v744
    %v1061 = vpack.c.b16 %v749, %v745
    %v1062 = vpack.c.b16 %v750, %v746
    %v1063 = vpack.c.b16 %v755, %v751
    %v1064 = vpack.c.b16 %v756, %v752
    %v1065 = vpack.c.b16 %v757, %v753
    %v1066 = vpack.c.b16 %v758, %v754
    %v1067 = vpack.c.b16 %v763, %v759
    %v1068 = vpack.c.b16 %v764, %v760
    %v1069 = vpack.c.b16 %v765, %v761
    %v1070 = vpack.c.b16 %v766, %v762
    %v1071 = vpack.c.b16 %v771, %v767
    %v1072 = vpack.c.b16 %v772, %v768
    %v1073 = vpack.c.b16 %v773, %v769
    %v1074 = vpack.c.b16 %v774, %v770
    %v1075 = vpack.c.b16 %v779, %v775
    %v1076 = vpack.c.b16 %v780, %v776
    %v1077 = vpack.c.b16 %v781, %v777
    %v1078 = vpack.c.b16 %v782, %v778
    %v1079 = vpack.c.b16 %v787, %v783
    %v1080 = vpack.c.b16 %v788, %v784
    %v1081 = vpack.c.b16 %v789, %v785
    %v1082 = vpack.c.b16 %v790, %v786
    %v1083 = vpack.c.b16 %v795, %v791
    %v1084 = vpack.c.b16 %v796, %v792
    %v1085 = vpack.c.b16 %v797, %v793
    %v1086 = vpack.c.b16 %v798, %v794
    %v1087 = vpack.c.b16 %v803, %v799
    %v1088 = vpack.c.b16 %v804, %v800
    %v1089 = vpack.c.b16 %v805, %v801
    %v1090 = vpack.c.b16 %v806, %v802
    %v1091 = vpack.c.b16 %v811, %v807
    %v1092 = vpack.c.b16 %v812, %v808
    %v1093 = vpack.c.b16 %v813, %v809
    %v1094 = vpack.c.b16 %v814, %v810
    %v1095 = vpack.c.b16 %v819, %v815
    %v1096 = vpack.c.b16 %v820, %v816
    %v1097 = vpack.c.b16 %v821, %v817
    %v1098 = vpack.c.b16 %v822, %v818
    %v1099 = vpack.c.b16 %v827, %v823
    %v1100 = vpack.c.b16 %v828, %v824
    %v1101 = vpack.c.b16 %v829, %v825
    %v1102 = vpack.c.b16 %v830, %v826
    %v1103 = vpack.c.b16 %v835, %v831
    %v1104 = vpack.c.b16 %v836, %v832
    %v1105 = vpack.c.b16 %v837, %v833
    %v1106 = vpack.c.b16 %v838, %v834
    %v1107 = vpack.c.b16 %v843, %v839
    %v1108 = vpack.c.b16 %v844, %v840
    %v1109 = vpack.c.b16 %v845, %v841
    %v1110 = vpack.c.b16 %v846, %v842
    %v1111 = vpack.c.b16 %v851, %v847
    %v1112 = vpack.c.b16 %v852, %v848
    %v1113 = vpack.c.b16 %v853, %v849
    %v1114 = vpack.c.b16 %v854, %v850
    %v1115 = vpack.c.b16 %v859, %v855
    %v1116 = vpack.c.b16 %v860, %v856
    %v1117 = vpack.c.b16 %v861, %v857
    %v1118 = vpack.c.b16 %v862, %v858
    %v1119 = vpack.c.b16 %v867, %v863
    %v1120 = vpack.c.b16 %v868, %v864
    %v1121 = vpack.c.b16 %v869, %v865
    %v1122 = vpack.c.b16 %v870, %v866
    %v1123 = vpack.c.b16 %v875, %v871
    %v1124 = vpack.c.b16 %v876, %v872
    %v1125 = vpack.c.b16 %v877, %v873
    %v1126 = vpack.c.b16 %v878, %v874
    %v1127 = vpack.c.b16 %v883, %v879
    %v1128 = vpack.c.b16 %v884, %v880
    %v1129 = vpack.c.b16 %v885, %v881
    %v1130 = vpack.c.b16 %v886, %v882
    %v1131 = vpack.c.b16 %v891, %v887
    %v1132 = vpack.c.b16 %v892, %v888
    %v1133 = vpack.c.b16 %v893, %v889
    %v1134 = vpack.c.b16 %v894, %v890
    %v1135 = vpack.c.b16 %v899, %v895
    %v1136 = vpack.c.b16 %v900, %v896
    %v1137 = vpack.c.b16 %v901, %v897
    %v1138 = vpack.c.b16 %v902, %v898
    %v1139 = vpack.c.b16 %v907, %v903
    %v1140 = vpack.c.b16 %v908, %v904
    %v1141 = vpack.c.b16 %v909, %v905
    %v1142 = vpack.c.b16 %v910, %v906
    %v1143 = vpack.c.b16 %v915, %v911
    %v1144 = vpack.c.b16 %v916, %v912
    %v1145 = vpack.c.b16 %v917, %v913
    %v1146 = vpack.c.b16 %v918, %v914
    %v1147 = vpack.c.b16 %v923, %v919
    %v1148 = vpack.c.b16 %v924, %v920
    %v1149 = vpack.c.b16 %v925, %v921
    %v1150 = vpack.c.b16 %v926, %v922
    %v1151 = vpack.c.b16 %v931, %v927
    %v1152 = vpack.c.b16 %v932, %v928
    %v1153 = vpack.c.b16 %v933, %v929
    %v1154 = vpack.c.b16 %v934, %v930
    %v1155 = vpack.c.b16 %v939, %v935
    %v1156 = vpack.c.b16 %v940, %v936
    %v1157 = vpack.c.b16 %v941, %v937
    %v1158 = vpack.c.b16 %v942, %v938
    %v1159 = vpack.c.b16 %v947, %v943
    %v1160 = vpack.c.b16 %v948, %v944
    %v1161 = vpack.c.b16 %v949, %v945
    %v1162 = vpack.c.b16 %v950, %v946
    %v1163 = vpack.c.b16 %v955, %v951
    %v1164 = vpack.c.b16 %v956, %v952
    %v1165 = vpack.c.b16 %v957, %v953
    %v1166 = vpack.c.b16 %v958, %v954
    %v1167 = vpack.c.b16 %v963, %v959
    %v1168 = vpack.c.b16 %v964, %v960
    %v1169 = vpack.c.b16 %v965, %v961
    %v1170 = vpack.c.b16 %v966, %v962
    %v1171 = vpack.c.b16 %v971, %v967
    %v1172 = vpack.c.b16 %v972, %v968
    %v1173 = vpack.c.b16 %v973, %v969
    %v1174 = vpack.c.b16 %v974, %v970
    %v1175 = vpack.c.b16 %v979, %v975
    %v1176 = vpack.c.b16 %v980, %v976
    %v1177 = vpack.c.b16 %v981, %v977
    %v1178 = vpack.c.b16 %v982, %v978
    %v1179 = vpack.c.b16 %v987, %v983
    %v1180 = vpack.c.b16 %v988, %v984
    %v1181 = vpack.c.b16 %v989, %v985
    %v1182 = vpack.c.b16 %v990, %v986
    %1375 = vmatprep.subr.bf16.mxu0 %v992
    %1376 = vmatpush1.bf16.msra.mxu0 %v991
    %1377 = vmatprep.subr.bf16.mxu0 %v996
    %1378 = vmatpush1.bf16.msra.mxu0 %v995
    %1379 = vmatprep.subr.bf16.mxu0 %v1000
    %1380 = vmatpush1.bf16.msra.mxu0 %v999
    %1381 = vmatprep.subr.bf16.mxu0 %v1004
    %1382 = vmatpush1.bf16.msra.mxu0 %v1003
    %1383 = vmatprep.subr.bf16.mxu0 %v1008
    %1384 = vmatpush1.bf16.msra.mxu0 %v1007
    %1385 = vmatprep.subr.bf16.mxu0 %v1012
    %1386 = vmatpush1.bf16.msra.mxu0 %v1011
    %1387 = vmatprep.subr.bf16.mxu0 %v1016
    %1388 = vmatpush1.bf16.msra.mxu0 %v1015
    %1389 = vmatprep.subr.bf16.mxu0 %v1020
    %1390 = vmatpush1.bf16.msra.mxu0 %v1019
    %1391 = vmatprep.subr.bf16.mxu0 %v1024
    %1392 = vmatpush1.bf16.msra.mxu0 %v1023
    %1393 = vmatprep.subr.bf16.mxu0 %v1028
    %1394 = vmatpush1.bf16.msra.mxu0 %v1027
    %1395 = vmatprep.subr.bf16.mxu0 %v1032
    %1396 = vmatpush1.bf16.msra.mxu0 %v1031
    %1397 = vmatprep.subr.bf16.mxu0 %v1036
    %1398 = vmatpush1.bf16.msra.mxu0 %v1035
    %1399 = vmatprep.subr.bf16.mxu0 %v1040
    %1400 = vmatpush1.bf16.msra.mxu0 %v1039
    %1401 = vmatprep.subr.bf16.mxu0 %v1044
    %1402 = vmatpush1.bf16.msra.mxu0 %v1043
    %1403 = vmatprep.subr.bf16.mxu0 %v1048
    %1404 = vmatpush1.bf16.msra.mxu0 %v1047
    %1405 = vmatprep.subr.bf16.mxu0 %v1052
    %1406 = vmatpush1.bf16.msra.mxu0 %v1051
    %1407 = vmatprep.mubr.bf16.mxu0 %v196
    %1408 = vmatmul.mubr.bf16.gmra.mrb[0].mxu0 %v195
    %v1409 = vpop.f32.mrb[0].mxu0
    %v1410 = vadd.f32 %v398, %v1409
    %v1411 = vpop.f32.mrb[0].mxu0
    %v1412 = vadd.f32 %v402, %v1411
    %v1413 = vpop.f32.mrb[0].mxu0
    %v1414 = vadd.f32 %v398, %v1413
    %v1415 = vpop.f32.mrb[0].mxu0
    %v1416 = vadd.f32 %v402, %v1415
    %1417 = vdwg.mxu0
    %1418 = vmatprep.subr.bf16.mxu0 %v1056
    %1419 = vmatpush1.bf16.msra.mxu0 %v1055
    %1420 = vmatprep.subr.bf16.mxu0 %v1060
    %1421 = vmatpush1.bf16.msra.mxu0 %v1059
    %1422 = vmatprep.subr.bf16.mxu0 %v1064
    %1423 = vmatpush1.bf16.msra.mxu0 %v1063
    %1424 = vmatprep.subr.bf16.mxu0 %v1068
    %1425 = vmatpush1.bf16.msra.mxu0 %v1067
    %1426 = vmatprep.subr.bf16.mxu0 %v1072
    %1427 = vmatpush1.bf16.msra.mxu0 %v1071
    %1428 = vmatprep.subr.bf16.mxu0 %v1076
    %1429 = vmatpush1.bf16.msra.mxu0 %v1075
    %1430 = vmatprep.subr.bf16.mxu0 %v1080
    %1431 = vmatpush1.bf16.msra.mxu0 %v1079
    %1432 = vmatprep.subr.bf16.mxu0 %v1084
    %1433 = vmatpush1.bf16.msra.mxu0 %v1083
    %1434 = vmatprep.subr.bf16.mxu0 %v1088
    %1435 = vmatpush1.bf16.msra.mxu0 %v1087
    %1436 = vmatprep.subr.bf16.mxu0 %v1092
    %1437 = vmatpush1.bf16.msra.mxu0 %v1091
    %1438 = vmatprep.subr.bf16.mxu0 %v1096
    %1439 = vmatpush1.bf16.msra.mxu0 %v1095
    %1440 = vmatprep.subr.bf16.mxu0 %v1100
    %1441 = vmatpush1.bf16.msra.mxu0 %v1099
    %1442 = vmatprep.subr.bf16.mxu0 %v1104
    %1443 = vmatpush1.bf16.msra.mxu0 %v1103
    %1444 = vmatprep.subr.bf16.mxu0 %v1108
    %1445 = vmatpush1.bf16.msra.mxu0 %v1107
    %1446 = vmatprep.subr.bf16.mxu0 %v1112
    %1447 = vmatpush1.bf16.msra.mxu0 %v1111
    %1448 = vmatprep.subr.bf16.mxu0 %v1116
    %1449 = vmatpush1.bf16.msra.mxu0 %v1115
    %1450 = vmatprep.mubr.bf16.mxu0 %v198
    %1451 = vmatmul.mubr.bf16.gmra.mrb[0].mxu0 %v197
    %v1452 = vpop.f32.mrb[0].mxu0
    %v1453 = vadd.f32 %v1410, %v1452
    %v1454 = vpop.f32.mrb[0].mxu0
    %v1455 = vadd.f32 %v1412, %v1454
    %v1456 = vpop.f32.mrb[0].mxu0
    %v1457 = vadd.f32 %v1414, %v1456
    %v1458 = vpop.f32.mrb[0].mxu0
    %v1459 = vadd.f32 %v1416, %v1458
    %1460 = vdwg.mxu0
    %1461 = vmatprep.subr.bf16.mxu0 %v1120
    %1462 = vmatpush1.bf16.msra.mxu0 %v1119
    %1463 = vmatprep.subr.bf16.mxu0 %v1124
    %1464 = vmatpush1.bf16.msra.mxu0 %v1123
    %1465 = vmatprep.subr.bf16.mxu0 %v1128
    %1466 = vmatpush1.bf16.msra.mxu0 %v1127
    %1467 = vmatprep.subr.bf16.mxu0 %v1132
    %1468 = vmatpush1.bf16.msra.mxu0 %v1131
    %1469 = vmatprep.subr.bf16.mxu0 %v1136
    %1470 = vmatpush1.bf16.msra.mxu0 %v1135
    %1471 = vmatprep.subr.bf16.mxu0 %v1140
    %1472 = vmatpush1.bf16.msra.mxu0 %v1139
    %1473 = vmatprep.subr.bf16.mxu0 %v1144
    %1474 = vmatpush1.bf16.msra.mxu0 %v1143
    %1475 = vmatprep.subr.bf16.mxu0 %v1148
    %1476 = vmatpush1.bf16.msra.mxu0 %v1147
    %1477 = vmatprep.subr.bf16.mxu0 %v1152
    %1478 = vmatpush1.bf16.msra.mxu0 %v1151
    %1479 = vmatprep.subr.bf16.mxu0 %v1156
    %1480 = vmatpush1.bf16.msra.mxu0 %v1155
    %1481 = vmatprep.subr.bf16.mxu0 %v1160
    %1482 = vmatpush1.bf16.msra.mxu0 %v1159
    %1483 = vmatprep.subr.bf16.mxu0 %v1164
    %1484 = vmatpush1.bf16.msra.mxu0 %v1163
    %1485 = vmatprep.subr.bf16.mxu0 %v1168
    %1486 = vmatpush1.bf16.msra.mxu0 %v1167
    %1487 = vmatprep.subr.bf16.mxu0 %v1172
    %1488 = vmatpush1.bf16.msra.mxu0 %v1171
    %1489 = vmatprep.subr.bf16.mxu0 %v1176
    %1490 = vmatpush1.bf16.msra.mxu0 %v1175
    %1491 = vmatprep.subr.bf16.mxu0 %v1180
    %1492 = vmatpush1.bf16.msra.mxu0 %v1179
    %1493 = vmatprep.mubr.bf16.mxu0 %v200
    %1494 = vmatmul.mubr.bf16.gmra.mrb[0].mxu0 %v199
    %v1495 = vpop.f32.mrb[0].mxu0
    %v1496 = vadd.f32 %v1453, %v1495
    %v1497 = vpop.f32.mrb[0].mxu0
    %v1498 = vadd.f32 %v1455, %v1497
    %v1499 = vpop.f32.mrb[0].mxu0
    %v1500 = vadd.f32 %v1457, %v1499
    %v1501 = vpop.f32.mrb[0].mxu0
    %v1502 = vadd.f32 %v1459, %v1501
    %1503 = vdwg.mxu0
    %1504 = vmatprep.subr.bf16.mxu0 %v994
    %1505 = vmatpush1.bf16.msra.mxu0 %v993
    %1506 = vmatprep.subr.bf16.mxu0 %v998
    %1507 = vmatpush1.bf16.msra.mxu0 %v997
    %1508 = vmatprep.subr.bf16.mxu0 %v1002
    %1509 = vmatpush1.bf16.msra.mxu0 %v1001
    %1510 = vmatprep.subr.bf16.mxu0 %v1006
    %1511 = vmatpush1.bf16.msra.mxu0 %v1005
    %1512 = vmatprep.subr.bf16.mxu0 %v1010
    %1513 = vmatpush1.bf16.msra.mxu0 %v1009
    %1514 = vmatprep.subr.bf16.mxu0 %v1014
    %1515 = vmatpush1.bf16.msra.mxu0 %v1013
    %1516 = vmatprep.subr.bf16.mxu0 %v1018
    %1517 = vmatpush1.bf16.msra.mxu0 %v1017
    %1518 = vmatprep.subr.bf16.mxu0 %v1022
    %1519 = vmatpush1.bf16.msra.mxu0 %v1021
    %1520 = vmatprep.subr.bf16.mxu0 %v1026
    %1521 = vmatpush1.bf16.msra.mxu0 %v1025
    %1522 = vmatprep.subr.bf16.mxu0 %v1030
    %1523 = vmatpush1.bf16.msra.mxu0 %v1029
    %1524 = vmatprep.subr.bf16.mxu0 %v1034
    %1525 = vmatpush1.bf16.msra.mxu0 %v1033
    %1526 = vmatprep.subr.bf16.mxu0 %v1038
    %1527 = vmatpush1.bf16.msra.mxu0 %v1037
    %1528 = vmatprep.subr.bf16.mxu0 %v1042
    %1529 = vmatpush1.bf16.msra.mxu0 %v1041
    %1530 = vmatprep.subr.bf16.mxu0 %v1046
    %1531 = vmatpush1.bf16.msra.mxu0 %v1045
    %1532 = vmatprep.subr.bf16.mxu0 %v1050
    %1533 = vmatpush1.bf16.msra.mxu0 %v1049
    %1534 = vmatprep.subr.bf16.mxu0 %v1054
    %1535 = vmatpush1.bf16.msra.mxu0 %v1053
    %1536 = vmatprep.mubr.bf16.mxu0 %v196
    %1537 = vmatmul.mubr.bf16.gmra.mrb[0].mxu0 %v195
    %v1538 = vpop.f32.mrb[0].mxu0
    %v1539 = vadd.f32 %v406, %v1538
    %v1540 = vpop.f32.mrb[0].mxu0
    %v1541 = vadd.f32 %v410, %v1540
    %v1542 = vpop.f32.mrb[0].mxu0
    %v1543 = vadd.f32 %v406, %v1542
    %v1544 = vpop.f32.mrb[0].mxu0
    %v1545 = vadd.f32 %v410, %v1544
    %1546 = vdwg.mxu0
    %1547 = vmatprep.subr.bf16.mxu0 %v1058
    %1548 = vmatpush1.bf16.msra.mxu0 %v1057
    %1549 = vmatprep.subr.bf16.mxu0 %v1062
    %1550 = vmatpush1.bf16.msra.mxu0 %v1061
    %1551 = vmatprep.subr.bf16.mxu0 %v1066
    %1552 = vmatpush1.bf16.msra.mxu0 %v1065
    %1553 = vmatprep.subr.bf16.mxu0 %v1070
    %1554 = vmatpush1.bf16.msra.mxu0 %v1069
    %1555 = vmatprep.subr.bf16.mxu0 %v1074
    %1556 = vmatpush1.bf16.msra.mxu0 %v1073
    %1557 = vmatprep.subr.bf16.mxu0 %v1078
    %1558 = vmatpush1.bf16.msra.mxu0 %v1077
    %1559 = vmatprep.subr.bf16.mxu0 %v1082
    %1560 = vmatpush1.bf16.msra.mxu0 %v1081
    %1561 = vmatprep.subr.bf16.mxu0 %v1086
    %1562 = vmatpush1.bf16.msra.mxu0 %v1085
    %1563 = vmatprep.subr.bf16.mxu0 %v1090
    %1564 = vmatpush1.bf16.msra.mxu0 %v1089
    %1565 = vmatprep.subr.bf16.mxu0 %v1094
    %1566 = vmatpush1.bf16.msra.mxu0 %v1093
    %1567 = vmatprep.subr.bf16.mxu0 %v1098
    %1568 = vmatpush1.bf16.msra.mxu0 %v1097
    %1569 = vmatprep.subr.bf16.mxu0 %v1102
    %1570 = vmatpush1.bf16.msra.mxu0 %v1101
    %1571 = vmatprep.subr.bf16.mxu0 %v1106
    %1572 = vmatpush1.bf16.msra.mxu0 %v1105
    %1573 = vmatprep.subr.bf16.mxu0 %v1110
    %1574 = vmatpush1.bf16.msra.mxu0 %v1109
    %1575 = vmatprep.subr.bf16.mxu0 %v1114
    %1576 = vmatpush1.bf16.msra.mxu0 %v1113
    %1577 = vmatprep.subr.bf16.mxu0 %v1118
    %1578 = vmatpush1.bf16.msra.mxu0 %v1117
    %1579 = vmatprep.mubr.bf16.mxu0 %v198
    %1580 = vmatmul.mubr.bf16.gmra.mrb[0].mxu0 %v197
    %v1581 = vpop.f32.mrb[0].mxu0
    %v1582 = vadd.f32 %v1539, %v1581
    %v1583 = vpop.f32.mrb[0].mxu0
    %v1584 = vadd.f32 %v1541, %v1583
    %v1585 = vpop.f32.mrb[0].mxu0
    %v1586 = vadd.f32 %v1543, %v1585
    %v1587 = vpop.f32.mrb[0].mxu0
    %v1588 = vadd.f32 %v1545, %v1587
    %1589 = vdwg.mxu0
    %1590 = vmatprep.subr.bf16.mxu0 %v1122
    %1591 = vmatpush1.bf16.msra.mxu0 %v1121
    %1592 = vmatprep.subr.bf16.mxu0 %v1126
    %1593 = vmatpush1.bf16.msra.mxu0 %v1125
    %1594 = vmatprep.subr.bf16.mxu0 %v1130
    %1595 = vmatpush1.bf16.msra.mxu0 %v1129
    %1596 = vmatprep.subr.bf16.mxu0 %v1134
    %1597 = vmatpush1.bf16.msra.mxu0 %v1133
    %1598 = vmatprep.subr.bf16.mxu0 %v1138
    %1599 = vmatpush1.bf16.msra.mxu0 %v1137
    %1600 = vmatprep.subr.bf16.mxu0 %v1142
    %1601 = vmatpush1.bf16.msra.mxu0 %v1141
    %1602 = vmatprep.subr.bf16.mxu0 %v1146
    %1603 = vmatpush1.bf16.msra.mxu0 %v1145
    %1604 = vmatprep.subr.bf16.mxu0 %v1150
    %1605 = vmatpush1.bf16.msra.mxu0 %v1149
    %1606 = vmatprep.subr.bf16.mxu0 %v1154
    %1607 = vmatpush1.bf16.msra.mxu0 %v1153
    %1608 = vmatprep.subr.bf16.mxu0 %v1158
    %1609 = vmatpush1.bf16.msra.mxu0 %v1157
    %1610 = vmatprep.subr.bf16.mxu0 %v1162
    %1611 = vmatpush1.bf16.msra.mxu0 %v1161
    %1612 = vmatprep.subr.bf16.mxu0 %v1166
    %1613 = vmatpush1.bf16.msra.mxu0 %v1165
    %1614 = vmatprep.subr.bf16.mxu0 %v1170
    %1615 = vmatpush1.bf16.msra.mxu0 %v1169
    %1616 = vmatprep.subr.bf16.mxu0 %v1174
    %1617 = vmatpush1.bf16.msra.mxu0 %v1173
    %1618 = vmatprep.subr.bf16.mxu0 %v1178
    %1619 = vmatpush1.bf16.msra.mxu0 %v1177
    %1620 = vmatprep.subr.bf16.mxu0 %v1182
    %1621 = vmatpush1.bf16.msra.mxu0 %v1181
    %1622 = vmatprep.mubr.bf16.mxu0 %v200
    %1623 = vmatmul.mubr.bf16.gmra.mrb[0].mxu0 %v199
    %v1624 = vpop.f32.mrb[0].mxu0
    %v1625 = vadd.f32 %v1582, %v1624
    %v1626 = vpop.f32.mrb[0].mxu0
    %v1627 = vadd.f32 %v1584, %v1626
    %v1628 = vpop.f32.mrb[0].mxu0
    %v1629 = vadd.f32 %v1586, %v1628
    %v1630 = vpop.f32.mrb[0].mxu0
    %v1631 = vadd.f32 %v1588, %v1630
    %1632 = vdwg.mxu0
    %v1641 = vcombine.low %v1496, %v1498
    %v1642 = vcombine.high %v1496, %v1498
    %v1643 = vcombine.low %v1625, %v1627
    %v1644 = vcombine.high %v1625, %v1627
    %v1646 = vunpack.c.l.s4 1983009808
    %v1647 = vunpack.c.0.s8 %v1646
    %v1648 = vlaneseq
    %v1649 = vshrl.u32 %v1648, 7
    %v1650 = vsub.s32 %v1647, %v1649
    %v1651 = vrot.slane %v1641, %v1650
    %v1653 = vunpack.c.l.s4 1983009808
    %v1654 = vunpack.c.0.s8 %v1653
    %v1655 = vlaneseq
    %v1656 = vshrl.u32 %v1655, 7
    %v1657 = vsub.s32 %v1654, %v1656
    %v1658 = vrot.slane %v1642, %v1657
    %v1660 = vunpack.c.l.s4 1983009808
    %v1661 = vunpack.c.0.s8 %v1660
    %v1662 = vlaneseq
    %v1663 = vshrl.u32 %v1662, 7
    %v1664 = vsub.s32 %v1661, %v1663
    %v1665 = vrot.slane %v1643, %v1664
    %v1667 = vunpack.c.l.s4 1983009808
    %v1668 = vunpack.c.0.s8 %v1667
    %v1669 = vlaneseq
    %v1670 = vshrl.u32 %v1669, 7
    %v1671 = vsub.s32 %v1668, %v1670
    %v1672 = vrot.slane %v1644, %v1671
    %v1673 = vcombine.low %v1651, %v1665
    %v1674 = vcombine.high %v1651, %v1665
    %v1675 = vcombine.low %v1658, %v1672
    %v1676 = vcombine.high %v1658, %v1672
    %v1677 = vcombine.low %v1500, %v1502
    %v1678 = vcombine.high %v1500, %v1502
    %v1679 = vcombine.low %v1629, %v1631
    %v1680 = vcombine.high %v1629, %v1631
    %v1682 = vunpack.c.l.s4 1983009808
    %v1683 = vunpack.c.0.s8 %v1682
    %v1684 = vlaneseq
    %v1685 = vshrl.u32 %v1684, 7
    %v1686 = vsub.s32 %v1683, %v1685
    %v1687 = vrot.slane %v1677, %v1686
    %v1689 = vunpack.c.l.s4 1983009808
    %v1690 = vunpack.c.0.s8 %v1689
    %v1691 = vlaneseq
    %v1692 = vshrl.u32 %v1691, 7
    %v1693 = vsub.s32 %v1690, %v1692
    %v1694 = vrot.slane %v1678, %v1693
    %v1696 = vunpack.c.l.s4 1983009808
    %v1697 = vunpack.c.0.s8 %v1696
    %v1698 = vlaneseq
    %v1699 = vshrl.u32 %v1698, 7
    %v1700 = vsub.s32 %v1697, %v1699
    %v1701 = vrot.slane %v1679, %v1700
    %v1703 = vunpack.c.l.s4 1983009808
    %v1704 = vunpack.c.0.s8 %v1703
    %v1705 = vlaneseq
    %v1706 = vshrl.u32 %v1705, 7
    %v1707 = vsub.s32 %v1704, %v1706
    %v1708 = vrot.slane %v1680, %v1707
    %v1709 = vcombine.low %v1687, %v1701
    %v1710 = vcombine.high %v1687, %v1701
    %v1711 = vcombine.low %v1694, %v1708
    %v1712 = vcombine.high %v1694, %v1708
    %1721 = vst [vmem:[#allocation7] sm:$0xff] %v1673
    %1722 = vst [vmem:[#allocation7 + $0x8] sm:$0xff] %v1674
    %1723 = vst [vmem:[#allocation7 + $0x10] sm:$0xff] %v1675
    %1724 = vst [vmem:[#allocation7 + $0x18] sm:$0xff] %v1676
    %1725 = vst [vmem:[#allocation7 + $0x20] sm:$0xff] %v1709
    %1726 = vst [vmem:[#allocation7 + $0x28] sm:$0xff] %v1710
    %1727 = vst [vmem:[#allocation7 + $0x30] sm:$0xff] %v1711
    %1728 = vst [vmem:[#allocation7 + $0x38] sm:$0xff] %v1712
    // Predicated region
    $region22: #{tpu_custom_call.1} parent=1 // pred_check
      _
    $region23: #{tpu_custom_call.1} parent=1 // pred_check_branch
      %1730 = sbr.rel (0) target = $region25
    $region24: #{tpu_custom_call.1} parent=1 // pred_region
      %s1732 = ssub.s32 1024, 128
      %1733 = vsyncadd [#allocation4], %s1732
      %s1734 = sshll.u32 [#allocation7], 4
      %s1735 = int_to_ptr.vmem [resolvable:$true] %s1734
      %1740 = dma.vmem_to_hbm [thread:$0]  %s1735, 128, %s3, [#allocation4], 128, 128, 8
    $region25: #{tpu_custom_call.1} parent=1 // pred_fallthru
      _
    // Predicated region
    $region26: #{tpu_custom_call.1} parent=1 // pred_check
      _
    $region27: #{tpu_custom_call.1} parent=1 // pred_check_branch
      %1742 = sbr.rel (0) target = $region29
    $region28: #{tpu_custom_call.1} parent=1 // pred_region
      %1743 = dma.done [#allocation4], 1024
    $region29: #{tpu_custom_call.1} parent=1 // pred_fallthru
      _
    %1744 = vsyncpa [#allocation3], 1
    %1745 = vsyncpa [#allocation6], 1
    %1746 = vsyncpa [#allocation4], 1

</llo_original>
